<compile_context>
chip_gen: v6e
topology: v6e:2x2x1
jax: 0.10.0
libtpu: 0.0.40
codegen_flags: <defaults>
</compile_context>

<pallas_src>
import functools

import jax
import jax.numpy as jnp
from jax import lax
from jax.experimental import pallas as pl
from jax.experimental.pallas import tpu as pltpu

_EPS = 1e-5  # torch.nn.LayerNorm default
_LANE = 128


def _round_up(x, m):
    return ((x + m - 1) // m) * m


def _vmem_capacity_bytes():
    try:
        info = pltpu.get_tpu_info()
        cap = getattr(info, "vmem_capacity_bytes", None)
        if cap:
            return int(cap)
    except Exception:
        pass
    return 64 * 1024 * 1024  # conservative default (v7x per-core VMEM)


def _make_rows_kernel(true_c, eps):
    """LayerNorm over the full last dim of each row + residual (fn == identity)."""
    inv_c = float(1.0 / true_c)

    def kernel(x_ref, gb_ref, o_ref):
        x = x_ref[...].astype(jnp.float32)
        gamma = gb_ref[0:1, :]          # (1, C) f32, broadcasts over rows
        beta = gb_ref[1:2, :]           # (1, C)

        # One-pass statistics; ragged-tail garbage rows only affect themselves and
        # their stores are masked by Pallas, so no lane/row mask is needed.
        s = jnp.sum(x, axis=-1, keepdims=True)
        s2 = jnp.sum(x * x, axis=-1, keepdims=True)
        mean = s * inv_c
        var = jnp.maximum(s2 * inv_c - mean * mean, 0.0)
        inv_std = lax.rsqrt(var + eps)

        # LN(x)*gamma + beta + x  ==  x*(1+g) + (beta - mean*g),  g = gamma*inv_std
        g = gamma * inv_std
        o_ref[...] = (x * (1.0 + g) + (beta - mean * g)).astype(o_ref.dtype)

    return kernel


def _make_groups_kernel(true_c, eps):
    """Grouped LayerNorm: each 128-lane row holds 128//C independent LN groups.

    Group sums use a (128,128) block-diagonal ones matmul (free on the idle MXU of
    this memory-bound kernel) which also broadcasts each group statistic back to
    every lane of its group.
    """
    inv_c = float(1.0 / true_c)

    def kernel(x_ref, gb_ref, gmat_ref, o_ref):
        x = x_ref[...].astype(jnp.float32)
        gamma = gb_ref[0:1, :]          # (1, 128) = gamma tiled 128//C times
        beta = gb_ref[1:2, :]
        gmat = gmat_ref[...]            # (128, 128) block-diagonal ones, f32

        s = jnp.dot(x, gmat, preferred_element_type=jnp.float32)
        s2 = jnp.dot(x * x, gmat, preferred_element_type=jnp.float32)
        mean = s * inv_c
        var = jnp.maximum(s2 * inv_c - mean * mean, 0.0)
        inv_std = lax.rsqrt(var + eps)

        g = gamma * inv_std
        o_ref[...] = (x * (1.0 + g) + (beta - mean * g)).astype(o_ref.dtype)

    return kernel


@functools.partial(jax.jit, static_argnames=("tile_rows",))
def prenorm_residual0(x_nchw, gamma, beta, *, tile_rows=None):
    """x_nchw: (B, C, H, W); gamma/beta: (C,).  Returns (B, C, H, W)."""
    B, C, H, W = x_nchw.shape
    N = B * H * W
    dtype = x_nchw.dtype
    itemsize = jnp.dtype(dtype).itemsize

    gamma32 = gamma.astype(jnp.float32)
    beta32 = beta.astype(jnp.float32)

    # --- choose a lane-dense 2-D view of the contiguous activation (pure reshapes,
    # --- never a pad or a slice) --------------------------------------------------
    if C % _LANE == 0:
        mode = "rows"
        L, rows = C, N
        x2d = x_nchw.reshape(rows, L)
        gb = jnp.stack([gamma32, beta32], axis=0)                        # (2, C)
        extra_inputs, extra_specs = (), ()
    elif C < _LANE and _LANE % C == 0 and (N * C) % _LANE == 0:
        mode = "groups"
        k = _LANE // C
        L, rows = _LANE, (N * C) // _LANE
        x2d = x_nchw.reshape(rows, L)                                    # pure view
        gb = jnp.stack([jnp.tile(gamma32, k), jnp.tile(beta32, k)], 0)   # (2, 128)
        lane = jnp.arange(_LANE)
        gmat = (lane[:, None] // C == lane[None, :] // C).astype(jnp.float32)
        extra_inputs = (gmat,)
        extra_specs = (pl.BlockSpec((_LANE, _LANE), lambda i: (0, 0)),)
    else:
        # General C: last block dim equals the full array dim (masked stores, but
        # no extra pad/slice HBM passes).
        mode = "rows"
        L, rows = C, N
        x2d = x_nchw.reshape(rows, L)
        gb = jnp.stack([gamma32, beta32], axis=0)
        extra_inputs, extra_specs = (), ()

    # --- tile sizing (bytes-based, per TPU generation) ----------------------------
    pack = max(8, 32 // itemsize)           # sublane packing: 8 f32, 16 bf16, 32 int8
    vmem_cap = _vmem_capacity_bytes()
    vmem_limit = min((vmem_cap * 3) // 4, 96 * 1024 * 1024)
    lane_padded = _round_up(L, _LANE)       # VMEM-side lane padding for narrow C

    if tile_rows is None:
        # ~cap/16 bytes per input tile leaves room for double-buffered in+out plus
        # f32 intermediates inside vmem_limit (8 MiB on 128 MiB chips, 4 MiB on v7x).
        target_tile_bytes = max(1, min(8, vmem_cap // (16 * 1024 * 1024))) * 1024 * 1024
        tile_rows = max(pack, target_tile_bytes // (lane_padded * itemsize))
    tile_rows = max(pack, _round_up(int(tile_rows), pack))
    # Keep at least 2 grid steps so the "parallel" axis can shard across the two
    # v7x TensorCores even for small N (near-no-op on single-TC chips).
    tile_rows = min(tile_rows, max(pack, _round_up(pl.cdiv(rows, 2), pack)))

    grid = (pl.cdiv(rows, tile_rows),)      # ragged tail handled by Pallas masking

    kernel = (_make_groups_kernel(C, _EPS) if mode == "groups"
              else _make_rows_kernel(C, _EPS))

    out2d = pl.pallas_call(
        kernel,
        out_shape=jax.ShapeDtypeStruct((rows, L), dtype),
        grid_spec=pltpu.PrefetchScalarGridSpec(
            num_scalar_prefetch=0,
            grid=grid,
            in_specs=[
                pl.BlockSpec((tile_rows, L), lambda i: (i, 0)),
                pl.BlockSpec((2, L), lambda i: (0, 0)),
                *extra_specs,
            ],
            out_specs=pl.BlockSpec((tile_rows, L), lambda i: (i, 0)),
        ),
        compiler_params=pltpu.CompilerParams(
            dimension_semantics=("parallel",),
            vmem_limit_bytes=vmem_limit,
        ),
    )(x2d, gb, *extra_inputs)

    return out2d.reshape(B, C, H, W)


def _reference(x_nchw, gamma, beta):
    B, C, H, W = x_nchw.shape
    r = x_nchw.reshape(B * H * W, C).astype(jnp.float32)
    mean = jnp.mean(r, axis=-1, keepdims=True)
    var = jnp.mean((r - mean) ** 2, axis=-1, keepdims=True)
    t = (r - mean) / jnp.sqrt(var + _EPS) * gamma.astype(jnp.float32) + beta.astype(jnp.float32)
    return (t.reshape(B, C, H, W) + x_nchw.astype(jnp.float32)).astype(x_nchw.dtype)


if __name__ == "__main__":
    key = jax.random.PRNGKey(0)
    k1, k2, k3, k4, k5, k6 = jax.random.split(key, 6)

    # Case 1: small demo shape (C=4 -> grouped 128-lane path), default LN params.
    B, C, H, W = 2, 4, 16, 16
    x = jax.random.normal(k1, (B, C, H, W), dtype=jnp.float32)
    gamma = jnp.ones((C,), dtype=jnp.float32)   # nn.LayerNorm default init
    beta = jnp.zeros((C,), dtype=jnp.float32)
    out = jax.block_until_ready(prenorm_residual0(x, gamma, beta))
    ref = _reference(x, gamma, beta)
    assert out.shape == (B, C, H, W)
    assert jnp.allclose(out, ref, atol=1e-4, rtol=1e-4), "mismatch (grouped-C path)"

    # Case 2: lane-dense C (multiple of 128) with non-trivial affine params.
    B2, C2, H2, W2 = 2, 128, 8, 8
    x2 = jax.random.normal(k2, (B2, C2, H2, W2), dtype=jnp.float32)
    g2 = jax.random.normal(k3, (C2,), dtype=jnp.float32)
    b2 = jax.random.normal(k4, (C2,), dtype=jnp.float32)
    out2 = jax.block_until_ready(prenorm_residual0(x2, g2, b2))
    ref2 = _reference(x2, g2, b2)
    assert jnp.allclose(out2, ref2, atol=1e-4, rtol=1e-4), "mismatch (dense-C path)"

    # Case 3: model-like C=64 (grouped path, 2 groups per lane row), random affine.
    B3, C3, H3, W3 = 2, 64, 8, 8
    x3 = jax.random.normal(k5, (B3, C3, H3, W3), dtype=jnp.float32)
    g3 = jax.random.normal(k6, (C3,), dtype=jnp.float32)
    b3 = jax.random.normal(jax.random.fold_in(key, 3), (C3,), dtype=jnp.float32)
    out3 = jax.block_until_ready(prenorm_residual0(x3, g3, b3))
    ref3 = _reference(x3, g3, b3)
    assert jnp.allclose(out3, ref3, atol=1e-4, rtol=1e-4), "mismatch (grouped C=64 path)"

    # Case 4: ragged spatial shape -> general fallback (true-C blocks, masked stores,
    # ragged grid tail), with an explicit tile size.
    B4, C4, H4, W4 = 2, 4, 5, 7
    x4 = jax.random.normal(jax.random.fold_in(key, 7), (B4, C4, H4, W4), dtype=jnp.float32)
    out4 = jax.block_until_ready(prenorm_residual0(x4, gamma, beta, tile_rows=16))
    ref4 = _reference(x4, gamma, beta)
    assert jnp.allclose(out4, ref4, atol=1e-4, rtol=1e-4), "mismatch (ragged fallback path)"

    print("KERNEL_OK")
</pallas_src>

<mosaic_0001>
module attributes {stable_mosaic.version = 11 : i64} {
  func.func @kernel(%arg0: i32, %arg1: memref<8x128xf32, #tpu.memory_space<vmem>>, %arg2: memref<2x128xf32, #tpu.memory_space<vmem>>, %arg3: memref<128x128xf32, #tpu.memory_space<vmem>>, %arg4: memref<8x128xf32, #tpu.memory_space<vmem>>) attributes {dimension_semantics = [#tpu.dimension_semantics<parallel>], iteration_bounds = array<i64: 2>, scalar_prefetch = 0 : i64, scratch_operands = 0 : i64, tpu.core_type = #tpu.core_type<tc>, window_params = [{transform_indices = @transform_0, window_bounds = array<i64: 8, 128>}, {pipeline_mode = #tpu.pipeline_mode<synchronous>, transform_indices = @transform_1, window_bounds = array<i64: 2, 128>}, {pipeline_mode = #tpu.pipeline_mode<synchronous>, transform_indices = @transform_2, window_bounds = array<i64: 128, 128>}, {transform_indices = @transform_3, window_bounds = array<i64: 8, 128>}]} {
    %c0 = arith.constant 0 : index
    %c0_0 = arith.constant 0 : index
    %0 = vector.load %arg1[%c0, %c0_0] : memref<8x128xf32, #tpu.memory_space<vmem>>, vector<8x128xf32>
    %c0_1 = arith.constant 0 : index
    %c0_2 = arith.constant 0 : index
    %1 = vector.load %arg2[%c0_1, %c0_2] : memref<2x128xf32, #tpu.memory_space<vmem>>, vector<1x128xf32>
    %c1 = arith.constant 1 : index
    %c0_3 = arith.constant 0 : index
    %2 = vector.load %arg2[%c1, %c0_3] : memref<2x128xf32, #tpu.memory_space<vmem>>, vector<1x128xf32>
    %c0_4 = arith.constant 0 : index
    %c0_5 = arith.constant 0 : index
    %3 = vector.load %arg3[%c0_4, %c0_5] : memref<128x128xf32, #tpu.memory_space<vmem>>, vector<128x128xf32>
    %cst = arith.constant dense<0.000000e+00> : vector<8x128xf32>
    %4 = tpu.matmul %0, %3, %cst {dimension_numbers = #tpu.dot_dimension_numbers<[1], [0], [0], [1], [0, 0, 1, 1], [], []>} : vector<8x128xf32>, vector<128x128xf32>, vector<8x128xf32> -> vector<8x128xf32>
    %5 = arith.mulf %0, %0 : vector<8x128xf32>
    %cst_6 = arith.constant dense<0.000000e+00> : vector<8x128xf32>
    %6 = tpu.matmul %5, %3, %cst_6 {dimension_numbers = #tpu.dot_dimension_numbers<[1], [0], [0], [1], [0, 0, 1, 1], [], []>} : vector<8x128xf32>, vector<128x128xf32>, vector<8x128xf32> -> vector<8x128xf32>
    %cst_7 = arith.constant 2.500000e-01 : f32
    %7 = vector.broadcast %cst_7 : f32 to vector<8x128xf32>
    %8 = arith.mulf %4, %7 : vector<8x128xf32>
    %cst_8 = arith.constant 2.500000e-01 : f32
    %9 = vector.broadcast %cst_8 : f32 to vector<8x128xf32>
    %10 = arith.mulf %6, %9 : vector<8x128xf32>
    %11 = arith.mulf %8, %8 : vector<8x128xf32>
    %12 = arith.subf %10, %11 : vector<8x128xf32>
    %cst_9 = arith.constant 0.000000e+00 : f32
    %13 = vector.broadcast %cst_9 : f32 to vector<8x128xf32>
    %14 = arith.maximumf %12, %13 : vector<8x128xf32>
    %cst_10 = arith.constant 9.99999974E-6 : f32
    %15 = vector.broadcast %cst_10 : f32 to vector<8x128xf32>
    %16 = arith.addf %14, %15 : vector<8x128xf32>
    %17 = math.rsqrt %16 : vector<8x128xf32>
    %18 = vector.broadcast %1 : vector<1x128xf32> to vector<8x128xf32>
    %19 = arith.mulf %18, %17 : vector<8x128xf32>
    %cst_11 = arith.constant 1.000000e+00 : f32
    %20 = vector.broadcast %cst_11 : f32 to vector<8x128xf32>
    %21 = arith.addf %20, %19 : vector<8x128xf32>
    %22 = arith.mulf %0, %21 : vector<8x128xf32>
    %23 = arith.mulf %8, %19 : vector<8x128xf32>
    %24 = vector.broadcast %2 : vector<1x128xf32> to vector<8x128xf32>
    %25 = arith.subf %24, %23 : vector<8x128xf32>
    %26 = arith.addf %22, %25 : vector<8x128xf32>
    %c0_12 = arith.constant 0 : index
    %c0_13 = arith.constant 0 : index
    %27 = vector.load %arg4[%c0_12, %c0_13] : memref<8x128xf32, #tpu.memory_space<vmem>>, vector<8x128xf32>
    tpu.vector_store %arg4[%c0_12, %c0_13], %26 {strides = array<i32>} : memref<8x128xf32, #tpu.memory_space<vmem>>, vector<8x128xf32>,
    return
  }
  func.func @transform_0(%arg0: i32) -> (i32, i32) {
    %c0_i32 = arith.constant 0 : i32
    %c0_i32_0 = arith.constant 0 : i32
    return %arg0, %c0_i32 : i32, i32
  }
  func.func @transform_1(%arg0: i32) -> (i32, i32) {
    %c0_i32 = arith.constant 0 : i32
    %c0_i32_0 = arith.constant 0 : i32
    %c0_i32_1 = arith.constant 0 : i32
    return %c0_i32, %c0_i32_0 : i32, i32
  }
  func.func @transform_2(%arg0: i32) -> (i32, i32) {
    %c0_i32 = arith.constant 0 : i32
    %c0_i32_0 = arith.constant 0 : i32
    %c0_i32_1 = arith.constant 0 : i32
    return %c0_i32, %c0_i32_0 : i32, i32
  }
  func.func @transform_3(%arg0: i32) -> (i32, i32) {
    %c0_i32 = arith.constant 0 : i32
    %c0_i32_0 = arith.constant 0 : i32
    return %arg0, %c0_i32 : i32, i32
  }
}

</mosaic_0001>

<llo_original>
// kernel: tile.13
$region0: #{tile.13}
  #allocation0 [shape = 's32[1]{0}', space=sflag, size = 0x4, scoped, tag = 'scoped memory for tile.13']
  %s0 = inlined_call_operand.vmem [shape: f32[4], index: 0, kind: input, shape index: {}]
  %s1 = inlined_call_operand.vmem [shape: f32[32,4], index: 1, kind: output, shape index: {}]
  // Predicated region
  $region2: #{tile.13} parent=0 // pred_check
    _
  $region3: #{tile.13} parent=0 // pred_check_branch
    %3 = sbr.rel (0) target = $region5
  $region4: #{tile.13} parent=0 // pred_region
    _
  $region5: #{tile.13} parent=0 // pred_fallthru
    _
  %v4 = vld [vmem:[%s0] ss:$0 sm:$0xff]
  %5 = vst [vmem:[%s1] sm:$0xff] %v4
  %s6 = scalar_lea.vmem %s1, 8
  %7 = vst [vmem:[%s6] sm:$0xff] %v4
  %s8 = scalar_lea.vmem %s1, 16
  %9 = vst [vmem:[%s8] sm:$0xff] %v4
  %s10 = scalar_lea.vmem %s1, 24
  %11 = vst [vmem:[%s10] sm:$0xff] %v4

// kernel: tile.18
$region0: #{tile.18}
  %s0 = inlined_call_operand.vmem [shape: f32[32,4], index: 0, kind: input, shape index: {}]
  %s1 = inlined_call_operand.vmem [shape: f32[1,128], index: 1, kind: output, shape index: {}]
  $region1: #{tile.18} parent=0
    #allocation0 [shape = 'u8[4096]{0}', space=vmem, size = 0x1000, scoped, tag = 'scoped mem for output reshape']
    %v2 = vld [vmem:[%s0] sm:$0x1]
    %vm3 = vcmask 31744
    %4 = vst.msk [vmem:[#allocation0] sm:$0x1] %vm3, %v2
    %s5 = scalar_lea.vmem %s0, 31
    %v6 = vld [vmem:[%s5] sm:$0x1]
    %7 = vrot.lane.b32.xlu0 %v6, 124
    %v8 = vpop.permute.xlu0 %7
    %vm9 = vcmask 1048544
    %10 = vst.msk [vmem:[#allocation0] sm:$0x1] %vm9, %v8
    %s11 = scalar_lea.vmem %s0, 30
    %v12 = vld [vmem:[%s11] sm:$0x1]
    %13 = vrot.lane.b32.xlu0 %v12, 120
    %v14 = vpop.permute.xlu0 %13
    %vm15 = vcmask 1015744
    %16 = vst.msk [vmem:[#allocation0] sm:$0x1] %vm15, %v14
    %s17 = scalar_lea.vmem %s0, 29
    %v18 = vld [vmem:[%s17] sm:$0x1]
    %19 = vrot.lane.b32.xlu0 %v18, 116
    %v20 = vpop.permute.xlu0 %19
    %vm21 = vcmask 982944
    %22 = vst.msk [vmem:[#allocation0] sm:$0x1] %vm21, %v20
    %s23 = scalar_lea.vmem %s0, 28
    %v24 = vld [vmem:[%s23] sm:$0x1]
    %25 = vrot.lane.b32.xlu0 %v24, 112
    %v26 = vpop.permute.xlu0 %25
    %vm27 = vcmask 950144
    %28 = vst.msk [vmem:[#allocation0] sm:$0x1] %vm27, %v26
    %s29 = scalar_lea.vmem %s0, 27
    %v30 = vld [vmem:[%s29] sm:$0x1]
    %31 = vrot.lane.b32.xlu0 %v30, 108
    %v32 = vpop.permute.xlu0 %31
    %vm33 = vcmask 917344
    %34 = vst.msk [vmem:[#allocation0] sm:$0x1] %vm33, %v32
    %s35 = scalar_lea.vmem %s0, 26
    %v36 = vld [vmem:[%s35] sm:$0x1]
    %37 = vrot.lane.b32.xlu0 %v36, 104
    %v38 = vpop.permute.xlu0 %37
    %vm39 = vcmask 884544
    %40 = vst.msk [vmem:[#allocation0] sm:$0x1] %vm39, %v38
    %s41 = scalar_lea.vmem %s0, 25
    %v42 = vld [vmem:[%s41] sm:$0x1]
    %43 = vrot.lane.b32.xlu0 %v42, 100
    %v44 = vpop.permute.xlu0 %43
    %vm45 = vcmask 851744
    %46 = vst.msk [vmem:[#allocation0] sm:$0x1] %vm45, %v44
    %s47 = scalar_lea.vmem %s0, 24
    %v48 = vld [vmem:[%s47] sm:$0x1]
    %49 = vrot.lane.b32.xlu0 %v48, 96
    %v50 = vpop.permute.xlu0 %49
    %vm51 = vcmask 818944
    %52 = vst.msk [vmem:[#allocation0] sm:$0x1] %vm51, %v50
    %s53 = scalar_lea.vmem %s0, 23
    %v54 = vld [vmem:[%s53] sm:$0x1]
    %55 = vrot.lane.b32.xlu0 %v54, 92
    %v56 = vpop.permute.xlu0 %55
    %vm57 = vcmask 786144
    %58 = vst.msk [vmem:[#allocation0] sm:$0x1] %vm57, %v56
    %s59 = scalar_lea.vmem %s0, 22
    %v60 = vld [vmem:[%s59] sm:$0x1]
    %61 = vrot.lane.b32.xlu0 %v60, 88
    %v62 = vpop.permute.xlu0 %61
    %vm63 = vcmask 753344
    %64 = vst.msk [vmem:[#allocation0] sm:$0x1] %vm63, %v62
    %s65 = scalar_lea.vmem %s0, 21
    %v66 = vld [vmem:[%s65] sm:$0x1]
    %67 = vrot.lane.b32.xlu0 %v66, 84
    %v68 = vpop.permute.xlu0 %67
    %vm69 = vcmask 720544
    %70 = vst.msk [vmem:[#allocation0] sm:$0x1] %vm69, %v68
    %s71 = scalar_lea.vmem %s0, 20
    %v72 = vld [vmem:[%s71] sm:$0x1]
    %73 = vrot.lane.b32.xlu0 %v72, 80
    %v74 = vpop.permute.xlu0 %73
    %vm75 = vcmask 687744
    %76 = vst.msk [vmem:[#allocation0] sm:$0x1] %vm75, %v74
    %s77 = scalar_lea.vmem %s0, 19
    %v78 = vld [vmem:[%s77] sm:$0x1]
    %79 = vrot.lane.b32.xlu0 %v78, 76
    %v80 = vpop.permute.xlu0 %79
    %vm81 = vcmask 654944
    %82 = vst.msk [vmem:[#allocation0] sm:$0x1] %vm81, %v80
    %s83 = scalar_lea.vmem %s0, 18
    %v84 = vld [vmem:[%s83] sm:$0x1]
    %85 = vrot.lane.b32.xlu0 %v84, 72
    %v86 = vpop.permute.xlu0 %85
    %vm87 = vcmask 622144
    %88 = vst.msk [vmem:[#allocation0] sm:$0x1] %vm87, %v86
    %s89 = scalar_lea.vmem %s0, 17
    %v90 = vld [vmem:[%s89] sm:$0x1]
    %91 = vrot.lane.b32.xlu0 %v90, 68
    %v92 = vpop.permute.xlu0 %91
    %vm93 = vcmask 589344
    %94 = vst.msk [vmem:[#allocation0] sm:$0x1] %vm93, %v92
    %s95 = scalar_lea.vmem %s0, 16
    %v96 = vld [vmem:[%s95] sm:$0x1]
    %97 = vrot.lane.b32.xlu0 %v96, 64
    %v98 = vpop.permute.xlu0 %97
    %vm99 = vcmask 556544
    %100 = vst.msk [vmem:[#allocation0] sm:$0x1] %vm99, %v98
    %s101 = scalar_lea.vmem %s0, 15
    %v102 = vld [vmem:[%s101] sm:$0x1]
    %103 = vrot.lane.b32.xlu0 %v102, 60
    %v104 = vpop.permute.xlu0 %103
    %vm105 = vcmask 523744
    %106 = vst.msk [vmem:[#allocation0] sm:$0x1] %vm105, %v104
    %s107 = scalar_lea.vmem %s0, 14
    %v108 = vld [vmem:[%s107] sm:$0x1]
    %109 = vrot.lane.b32.xlu0 %v108, 56
    %v110 = vpop.permute.xlu0 %109
    %vm111 = vcmask 490944
    %112 = vst.msk [vmem:[#allocation0] sm:$0x1] %vm111, %v110
    %s113 = scalar_lea.vmem %s0, 13
    %v114 = vld [vmem:[%s113] sm:$0x1]
    %115 = vrot.lane.b32.xlu0 %v114, 52
    %v116 = vpop.permute.xlu0 %115
    %vm117 = vcmask 458144
    %118 = vst.msk [vmem:[#allocation0] sm:$0x1] %vm117, %v116
    %s119 = scalar_lea.vmem %s0, 12
    %v120 = vld [vmem:[%s119] sm:$0x1]
    %121 = vrot.lane.b32.xlu0 %v120, 48
    %v122 = vpop.permute.xlu0 %121
    %vm123 = vcmask 425344
    %124 = vst.msk [vmem:[#allocation0] sm:$0x1] %vm123, %v122
    %s125 = scalar_lea.vmem %s0, 11
    %v126 = vld [vmem:[%s125] sm:$0x1]
    %127 = vrot.lane.b32.xlu0 %v126, 44
    %v128 = vpop.permute.xlu0 %127
    %vm129 = vcmask 392544
    %130 = vst.msk [vmem:[#allocation0] sm:$0x1] %vm129, %v128
    %s131 = scalar_lea.vmem %s0, 10
    %v132 = vld [vmem:[%s131] sm:$0x1]
    %133 = vrot.lane.b32.xlu0 %v132, 40
    %v134 = vpop.permute.xlu0 %133
    %vm135 = vcmask 359744
    %136 = vst.msk [vmem:[#allocation0] sm:$0x1] %vm135, %v134
    %s137 = scalar_lea.vmem %s0, 9
    %v138 = vld [vmem:[%s137] sm:$0x1]
    %139 = vrot.lane.b32.xlu0 %v138, 36
    %v140 = vpop.permute.xlu0 %139
    %vm141 = vcmask 326944
    %142 = vst.msk [vmem:[#allocation0] sm:$0x1] %vm141, %v140
    %s143 = scalar_lea.vmem %s0, 8
    %v144 = vld [vmem:[%s143] sm:$0x1]
    %145 = vrot.lane.b32.xlu0 %v144, 32
    %v146 = vpop.permute.xlu0 %145
    %vm147 = vcmask 294144
    %148 = vst.msk [vmem:[#allocation0] sm:$0x1] %vm147, %v146
    %s149 = scalar_lea.vmem %s0, 7
    %v150 = vld [vmem:[%s149] sm:$0x1]
    %151 = vrot.lane.b32.xlu0 %v150, 28
    %v152 = vpop.permute.xlu0 %151
    %vm153 = vcmask 261344
    %154 = vst.msk [vmem:[#allocation0] sm:$0x1] %vm153, %v152
    %s155 = scalar_lea.vmem %s0, 6
    %v156 = vld [vmem:[%s155] sm:$0x1]
    %157 = vrot.lane.b32.xlu0 %v156, 24
    %v158 = vpop.permute.xlu0 %157
    %vm159 = vcmask 228544
    %160 = vst.msk [vmem:[#allocation0] sm:$0x1] %vm159, %v158
    %s161 = scalar_lea.vmem %s0, 5
    %v162 = vld [vmem:[%s161] sm:$0x1]
    %163 = vrot.lane.b32.xlu0 %v162, 20
    %v164 = vpop.permute.xlu0 %163
    %vm165 = vcmask 195744
    %166 = vst.msk [vmem:[#allocation0] sm:$0x1] %vm165, %v164
    %s167 = scalar_lea.vmem %s0, 4
    %v168 = vld [vmem:[%s167] sm:$0x1]
    %169 = vrot.lane.b32.xlu0 %v168, 16
    %v170 = vpop.permute.xlu0 %169
    %vm171 = vcmask 162944
    %172 = vst.msk [vmem:[#allocation0] sm:$0x1] %vm171, %v170
    %s173 = scalar_lea.vmem %s0, 3
    %v174 = vld [vmem:[%s173] sm:$0x1]
    %175 = vrot.lane.b32.xlu0 %v174, 12
    %v176 = vpop.permute.xlu0 %175
    %vm177 = vcmask 130144
    %178 = vst.msk [vmem:[#allocation0] sm:$0x1] %vm177, %v176
    %s179 = scalar_lea.vmem %s0, 2
    %v180 = vld [vmem:[%s179] sm:$0x1]
    %181 = vrot.lane.b32.xlu0 %v180, 8
    %v182 = vpop.permute.xlu0 %181
    %vm183 = vcmask 97344
    %184 = vst.msk [vmem:[#allocation0] sm:$0x1] %vm183, %v182
    %s185 = scalar_lea.vmem %s0, 1
    %v186 = vld [vmem:[%s185] sm:$0x1]
    %187 = vrot.lane.b32.xlu0 %v186, 4
    %v188 = vpop.permute.xlu0 %187
    %vm189 = vcmask 64544
    %190 = vst.msk [vmem:[#allocation0] sm:$0x1] %vm189, %v188
    %s192 = sshll.u32 1, 1
    %s193 = ssub.s32 %s192, 1
    %v195 = vld [vmem:[#allocation0] sm:%s193]
    %s196 = sshll.u32 1, 1
    %s197 = ssub.s32 %s196, 1
    %198 = vst [vmem:[%s1] sm:%s197] %v195

// kernel: prenorm_residual0.1
$region0: #{prenorm_residual0.1}
  #allocation0 [shape = 'u32[]', space=smem, size = 0x4, offset = 0x4, fixed_abs, tag = 'smem constant byte address 0x4 - core index']
  #allocation1 [shape = 'u32[144,128]{1,0:T(1,128)}', space=vmem, size = 0x12000, scoped, tag = 'internal scratch']
  %s0 = inlined_call_operand.vmem [shape: f32[16,128], index: 0, kind: input, shape index: {}]
  %s1 = inlined_call_operand.vmem [shape: f32[2,128], index: 1, kind: input, shape index: {}]
  %s2 = inlined_call_operand.vmem [shape: f32[128,128], index: 2, kind: input, shape index: {}]
  %s3 = inlined_call_operand.vmem [shape: f32[16,128], index: 3, kind: output, shape index: {}]
  %s4 = sld [smem:[#allocation0]]
  $region45: #{prenorm_residual0.1} parent=0
    _
  %s6 = ssub.s32 1, %s4
  %s7 = scalar_select 0, %s6, %s4
  loop: start=0, step=1, limit=4
  $region2: #{prenorm_residual0.1} parent=0 // loop_pre_header
    _
  $region3: #{prenorm_residual0.1} parent=0 // loop_header
    %s9 = sphi 0, %s13
    %p10 = scmp.ge.s32.totalorder %s9, 4
    %s19 = sphi 0, %s21
    %s22 = sphi 0, %s19
    %s23 = sphi 0, %s22
    %s39 = sphi 0, %s23
    %s43 = sphi 0, %s43
    %s45 = sphi 0, %s43
    %s46 = sphi 0, %s45
    %s60 = sphi 0, %s46
    %s64 = sphi 0, %s64
    %s66 = sphi 0, %s64
    %s67 = sphi 0, %s66
    %s81 = sphi 0, %s67
    %s87 = sphi 0, %s89
    %s90 = sphi 0, %s87
    %s91 = sphi 0, %s90
    %s107 = sphi 0, %s91
  $region4: #{prenorm_residual0.1} parent=0 // loop_header_branch
    %12 = sbr.rel (%p10) target = $region8
  $region5: #{prenorm_residual0.1} parent=0 // loop_body
    %s14 = ssub.s32 %s9, 1
    %s15 = ssub.s32 %s9, 2
    %s16 = sadd.s32 %s9, 1
    %s17 = ssub.s32 %s9, %s16
    %p18 = scmp.eq.s32.totalorder %s17, 0
    %s20 = sadd.s32 %s19, 1
    %s21 = scalar_select %p18, %s19, %s20
    %p24 = pneg %p18
    %p25 = scmp.eq.s32.totalorder %s9, 1
    %p26 = por %p24, %p25
    %p27 = scmp.ne.s32.totalorder %s19, %s22
    %p28 = scmp.eq.s32.totalorder %s9, 0
    %p29 = por %p27, %p28
    %p30 = scmp.ne.s32.totalorder %s19, %s22
    %p31 = scmp.eq.s32.totalorder %s14, 1
    %p32 = por %p30, %p31
    %p33 = scmp.ne.s32.totalorder %s22, %s23
    %p34 = scmp.eq.s32.totalorder %s14, 0
    %p35 = por %p33, %p34
    %p36 = scmp.ne.s32.totalorder %s22, %s23
    %p37 = scmp.eq.s32.totalorder %s15, 1
    %p38 = por %p36, %p37
    %p40 = scmp.ne.s32.totalorder %s23, %s39
    %p41 = scmp.eq.s32.totalorder %s15, 0
    %p42 = por %p40, %p41
    %s44 = sadd.s32 %s43, 1
    %p47 = scmp.eq.s32.totalorder %s9, 1
    %p48 = scmp.ne.s32.totalorder %s43, %s45
    %p49 = scmp.eq.s32.totalorder %s9, 0
    %p50 = por %p48, %p49
    %p51 = scmp.ne.s32.totalorder %s43, %s45
    %p52 = scmp.eq.s32.totalorder %s14, 1
    %p53 = por %p51, %p52
    %p54 = scmp.ne.s32.totalorder %s45, %s46
    %p55 = scmp.eq.s32.totalorder %s14, 0
    %p56 = por %p54, %p55
    %p57 = scmp.ne.s32.totalorder %s45, %s46
    %p58 = scmp.eq.s32.totalorder %s15, 1
    %p59 = por %p57, %p58
    %p61 = scmp.ne.s32.totalorder %s46, %s60
    %p62 = scmp.eq.s32.totalorder %s15, 0
    %p63 = por %p61, %p62
    %s65 = sadd.s32 %s64, 1
    %p68 = scmp.eq.s32.totalorder %s9, 1
    %p69 = scmp.ne.s32.totalorder %s64, %s66
    %p70 = scmp.eq.s32.totalorder %s9, 0
    %p71 = por %p69, %p70
    %p72 = scmp.ne.s32.totalorder %s64, %s66
    %p73 = scmp.eq.s32.totalorder %s14, 1
    %p74 = por %p72, %p73
    %p75 = scmp.ne.s32.totalorder %s66, %s67
    %p76 = scmp.eq.s32.totalorder %s14, 0
    %p77 = por %p75, %p76
    %p78 = scmp.ne.s32.totalorder %s66, %s67
    %p79 = scmp.eq.s32.totalorder %s15, 1
    %p80 = por %p78, %p79
    %p82 = scmp.ne.s32.totalorder %s67, %s81
    %p83 = scmp.eq.s32.totalorder %s15, 0
    %p84 = por %p82, %p83
    %s85 = ssub.s32 %s9, %s16
    %p86 = scmp.eq.s32.totalorder %s85, 0
    %s88 = sadd.s32 %s87, 1
    %s89 = scalar_select %p86, %s87, %s88
    %p92 = pneg %p86
    %p93 = scmp.eq.s32.totalorder %s9, 1
    %p94 = por %p92, %p93
    %p95 = scmp.ne.s32.totalorder %s87, %s90
    %p96 = scmp.eq.s32.totalorder %s9, 0
    %p97 = por %p95, %p96
    %p98 = scmp.ne.s32.totalorder %s87, %s90
    %p99 = scmp.eq.s32.totalorder %s14, 1
    %p100 = por %p98, %p99
    %p101 = scmp.ne.s32.totalorder %s90, %s91
    %p102 = scmp.eq.s32.totalorder %s14, 0
    %p103 = por %p101, %p102
    %p104 = scmp.ne.s32.totalorder %s90, %s91
    %p105 = scmp.eq.s32.totalorder %s15, 1
    %p106 = por %p104, %p105
    %p108 = scmp.ne.s32.totalorder %s91, %s107
    %p109 = scmp.eq.s32.totalorder %s15, 0
    %p110 = por %p108, %p109
    %p111 = scmp.le.s32.totalorder 1, %s9
    %p112 = scmp.lt.s32.totalorder %s9, 3
    %p113 = pnand %p111, %p112
    %p114 = pneg %p113
    // Predicated region
    $region9: #{prenorm_residual0.1} parent=5 // pred_check
      _
    $region10: #{prenorm_residual0.1} parent=5 // pred_check_branch
      %116 = sbr.rel (%p113) target = $region12
    $region11: #{prenorm_residual0.1} parent=5 // pred_region
      %s117 = ssub.s32 %s9, 1
      // Predicated region
      $region13: #{prenorm_residual0.1} parent=11 // pred_check
        %p118 = pneg %p56
      $region14: #{prenorm_residual0.1} parent=11 // pred_check_branch
        %120 = sbr.rel (%p118) target = $region16
      $region15: #{prenorm_residual0.1} parent=11 // pred_region
        _
      $region16: #{prenorm_residual0.1} parent=11 // pred_fallthru
        _
      // Predicated region
      $region17: #{prenorm_residual0.1} parent=11 // pred_check
        %p121 = pneg %p77
      $region18: #{prenorm_residual0.1} parent=11 // pred_check_branch
        %123 = sbr.rel (%p121) target = $region20
      $region19: #{prenorm_residual0.1} parent=11 // pred_region
        _
      $region20: #{prenorm_residual0.1} parent=11 // pred_fallthru
        _
    $region12: #{prenorm_residual0.1} parent=5 // pred_fallthru
      _
    %p124 = scmp.lt.s32.totalorder %s9, 2
    // Predicated region
    $region21: #{prenorm_residual0.1} parent=5 // pred_check
      %p125 = pneg %p124
    $region22: #{prenorm_residual0.1} parent=5 // pred_check_branch
      %127 = sbr.rel (%p125) target = $region24
    $region23: #{prenorm_residual0.1} parent=5 // pred_region
      // Predicated region
      $region25: #{prenorm_residual0.1} parent=23 // pred_check
        %p128 = pneg %p29
      $region26: #{prenorm_residual0.1} parent=23 // pred_check_branch
        %130 = sbr.rel (%p128) target = $region28
      $region27: #{prenorm_residual0.1} parent=23 // pred_region
        %p131 = scmp.lt.s32.totalorder %s9, 1
        %s132 = scalar_select %p131, %s9, 1
        %s133 = smul.addr %s132, 8
        %s134 = scalar_lea.vmem %s0, %s133
      $region28: #{prenorm_residual0.1} parent=23 // pred_fallthru
        _
    $region24: #{prenorm_residual0.1} parent=5 // pred_fallthru
      _
    %p135 = scmp.le.s32.totalorder 1, %s9
    %p136 = scmp.lt.s32.totalorder %s9, 3
    %p137 = pnand %p135, %p136
    %p138 = pneg %p137
    // Predicated region
    $region29: #{prenorm_residual0.1} parent=5 // pred_check
      _
    $region30: #{prenorm_residual0.1} parent=5 // pred_check_branch
      %140 = sbr.rel (%p137) target = $region32
    $region31: #{prenorm_residual0.1} parent=5 // pred_region
      %s141 = ssub.s32 %s9, 1
      %p142 = scmp.lt.s32.totalorder %s14, 1
      %s143 = scalar_select %p142, %s14, 1
      %s144 = smul.addr %s143, 8
      %s145 = scalar_lea.vmem %s0, %s144
      %p146 = pneg %p35
      %p147 = pneg %p32
      %p148 = pneg %p56
      %p149 = pneg %p53
      %p150 = pneg %p77
      %p151 = pneg %p74
      %p152 = pneg %p103
      %p153 = pneg %p100
      %p154 = scmp.lt.s32.totalorder %s14, 1
      %s155 = scalar_select %p154, %s14, 1
      %s156 = smul.addr %s155, 8
      %s157 = scalar_lea.vmem %s3, %s156
      %p158 = scmp.lt.s32.totalorder %s14, 1
      %s159 = scalar_select %p158, %s14, 1
      %s160 = smul.addr %s159, 8
      %s161 = scalar_lea.vmem %s0, %s160
      %p162 = scmp.lt.s32.totalorder %s14, 1
      %s163 = scalar_select %p162, %s14, 1
      %s164 = smul.addr %s163, 8
      %s165 = scalar_lea.vmem %s3, %s164
      %v166 = vld [vmem:[%s161] sm:$0xff]
      %v167 = vld [vmem:[%s1] sm:$0x1]
      %v168 = vld [vmem:[%s1 + $0x1] sm:$0x1]
      %v169 = vld [vmem:[%s2] sm:$0xff]
      %v170 = vld [vmem:[%s2 + $0x8] sm:$0xff]
      %v171 = vld [vmem:[%s2 + $0x10] sm:$0xff]
      %v172 = vld [vmem:[%s2 + $0x18] sm:$0xff]
      %v173 = vld [vmem:[%s2 + $0x20] sm:$0xff]
      %v174 = vld [vmem:[%s2 + $0x28] sm:$0xff]
      %v175 = vld [vmem:[%s2 + $0x30] sm:$0xff]
      %v176 = vld [vmem:[%s2 + $0x38] sm:$0xff]
      %v177 = vld [vmem:[%s2 + $0x40] sm:$0xff]
      %v178 = vld [vmem:[%s2 + $0x48] sm:$0xff]
      %v179 = vld [vmem:[%s2 + $0x50] sm:$0xff]
      %v180 = vld [vmem:[%s2 + $0x58] sm:$0xff]
      %v181 = vld [vmem:[%s2 + $0x60] sm:$0xff]
      %v182 = vld [vmem:[%s2 + $0x68] sm:$0xff]
      %v183 = vld [vmem:[%s2 + $0x70] sm:$0xff]
      %v184 = vld [vmem:[%s2 + $0x78] sm:$0xff]
      %185 = vmatprep.subr.mxu0 0.0
      %186 = vmatpush1.msra.mxu0 %v184
      %187 = vmatprep.subr.mxu0 0.0
      %188 = vmatpush1.msra.mxu0 %v183
      %189 = vmatprep.subr.mxu0 0.0
      %190 = vmatpush1.msra.mxu0 %v182
      %191 = vmatprep.subr.mxu0 0.0
      %192 = vmatpush1.msra.mxu0 %v181
      %193 = vmatprep.subr.mxu0 0.0
      %194 = vmatpush1.msra.mxu0 %v180
      %195 = vmatprep.subr.mxu0 0.0
      %196 = vmatpush1.msra.mxu0 %v179
      %197 = vmatprep.subr.mxu0 0.0
      %198 = vmatpush1.msra.mxu0 %v178
      %199 = vmatprep.subr.mxu0 0.0
      %200 = vmatpush1.msra.mxu0 %v177
      %201 = vmatprep.subr.mxu0 0.0
      %202 = vmatpush1.msra.mxu0 %v176
      %203 = vmatprep.subr.mxu0 0.0
      %204 = vmatpush1.msra.mxu0 %v175
      %205 = vmatprep.subr.mxu0 0.0
      %206 = vmatpush1.msra.mxu0 %v174
      %207 = vmatprep.subr.mxu0 0.0
      %208 = vmatpush1.msra.mxu0 %v173
      %209 = vmatprep.subr.mxu0 0.0
      %210 = vmatpush1.msra.mxu0 %v172
      %211 = vmatprep.subr.mxu0 0.0
      %212 = vmatpush1.msra.mxu0 %v171
      %213 = vmatprep.subr.mxu0 0.0
      %214 = vmatpush1.msra.mxu0 %v170
      %215 = vmatprep.subr.mxu0 0.0
      %216 = vmatpush1.msra.mxu0 %v169
      %217 = vmatprep.subr.mxu0 0.0
      %218 = vmatpush2.msra.mxu0 0.0
      %219 = vmatprep.subr.mxu0 0.0
      %220 = vmatpush2.msra.mxu0 0.0
      %221 = vmatprep.subr.mxu0 0.0
      %222 = vmatpush2.msra.mxu0 0.0
      %223 = vmatprep.subr.mxu0 0.0
      %224 = vmatpush2.msra.mxu0 0.0
      %225 = vmatprep.subr.mxu0 0.0
      %226 = vmatpush2.msra.mxu0 0.0
      %227 = vmatprep.subr.mxu0 0.0
      %228 = vmatpush2.msra.mxu0 0.0
      %229 = vmatprep.subr.mxu0 0.0
      %230 = vmatpush2.msra.mxu0 0.0
      %231 = vmatprep.subr.mxu0 0.0
      %232 = vmatpush2.msra.mxu0 0.0
      %233 = vmatprep.subr.mxu0 0.0
      %234 = vmatpush2.msra.mxu0 0.0
      %235 = vmatprep.subr.mxu0 0.0
      %236 = vmatpush2.msra.mxu0 0.0
      %237 = vmatprep.subr.mxu0 0.0
      %238 = vmatpush2.msra.mxu0 0.0
      %239 = vmatprep.subr.mxu0 0.0
      %240 = vmatpush2.msra.mxu0 0.0
      %241 = vmatprep.subr.mxu0 0.0
      %242 = vmatpush2.msra.mxu0 0.0
      %243 = vmatprep.subr.mxu0 0.0
      %244 = vmatpush2.msra.mxu0 0.0
      %245 = vmatprep.subr.mxu0 0.0
      %246 = vmatpush2.msra.mxu0 0.0
      %247 = vmatprep.subr.mxu0 0.0
      %248 = vmatpush2.msra.mxu0 0.0
      %249 = vmatprep.mubr.f32.mxu0 0.0
      %250 = vmatmul.mubr.f32.gmra.mxu0 %v166
      %v251 = vpop.f32.mrf.mxu0
      %v252 = vadd.f32 0.0, %v251
      %v253 = vpop.f32.mrf.mxu0
      %254 = vdwg.mxu0
      %v255 = vmul.f32 %v166, %v166
      %256 = vmatprep.subr.mxu0 0.0
      %257 = vmatpush1.msra.mxu0 %v184
      %258 = vmatprep.subr.mxu0 0.0
      %259 = vmatpush1.msra.mxu0 %v183
      %260 = vmatprep.subr.mxu0 0.0
      %261 = vmatpush1.msra.mxu0 %v182
      %262 = vmatprep.subr.mxu0 0.0
      %263 = vmatpush1.msra.mxu0 %v181
      %264 = vmatprep.subr.mxu0 0.0
      %265 = vmatpush1.msra.mxu0 %v180
      %266 = vmatprep.subr.mxu0 0.0
      %267 = vmatpush1.msra.mxu0 %v179
      %268 = vmatprep.subr.mxu0 0.0
      %269 = vmatpush1.msra.mxu0 %v178
      %270 = vmatprep.subr.mxu0 0.0
      %271 = vmatpush1.msra.mxu0 %v177
      %272 = vmatprep.subr.mxu0 0.0
      %273 = vmatpush1.msra.mxu0 %v176
      %274 = vmatprep.subr.mxu0 0.0
      %275 = vmatpush1.msra.mxu0 %v175
      %276 = vmatprep.subr.mxu0 0.0
      %277 = vmatpush1.msra.mxu0 %v174
      %278 = vmatprep.subr.mxu0 0.0
      %279 = vmatpush1.msra.mxu0 %v173
      %280 = vmatprep.subr.mxu0 0.0
      %281 = vmatpush1.msra.mxu0 %v172
      %282 = vmatprep.subr.mxu0 0.0
      %283 = vmatpush1.msra.mxu0 %v171
      %284 = vmatprep.subr.mxu0 0.0
      %285 = vmatpush1.msra.mxu0 %v170
      %286 = vmatprep.subr.mxu0 0.0
      %287 = vmatpush1.msra.mxu0 %v169
      %288 = vmatprep.subr.mxu0 0.0
      %289 = vmatpush2.msra.mxu0 0.0
      %290 = vmatprep.subr.mxu0 0.0
      %291 = vmatpush2.msra.mxu0 0.0
      %292 = vmatprep.subr.mxu0 0.0
      %293 = vmatpush2.msra.mxu0 0.0
      %294 = vmatprep.subr.mxu0 0.0
      %295 = vmatpush2.msra.mxu0 0.0
      %296 = vmatprep.subr.mxu0 0.0
      %297 = vmatpush2.msra.mxu0 0.0
      %298 = vmatprep.subr.mxu0 0.0
      %299 = vmatpush2.msra.mxu0 0.0
      %300 = vmatprep.subr.mxu0 0.0
      %301 = vmatpush2.msra.mxu0 0.0
      %302 = vmatprep.subr.mxu0 0.0
      %303 = vmatpush2.msra.mxu0 0.0
      %304 = vmatprep.subr.mxu0 0.0
      %305 = vmatpush2.msra.mxu0 0.0
      %306 = vmatprep.subr.mxu0 0.0
      %307 = vmatpush2.msra.mxu0 0.0
      %308 = vmatprep.subr.mxu0 0.0
      %309 = vmatpush2.msra.mxu0 0.0
      %310 = vmatprep.subr.mxu0 0.0
      %311 = vmatpush2.msra.mxu0 0.0
      %312 = vmatprep.subr.mxu0 0.0
      %313 = vmatpush2.msra.mxu0 0.0
      %314 = vmatprep.subr.mxu0 0.0
      %315 = vmatpush2.msra.mxu0 0.0
      %316 = vmatprep.subr.mxu0 0.0
      %317 = vmatpush2.msra.mxu0 0.0
      %318 = vmatprep.subr.mxu0 0.0
      %319 = vmatpush2.msra.mxu0 0.0
      %320 = vmatprep.mubr.f32.mxu0 0.0
      %321 = vmatmul.mubr.f32.gmra.mxu0 %v255
      %v322 = vpop.f32.mrf.mxu0
      %v323 = vadd.f32 0.0, %v322
      %v324 = vpop.f32.mrf.mxu0
      %325 = vdwg.mxu0
      %v326 = vmul.f32 %v252, 0.25
      %v327 = vmul.f32 %v323, 0.25
      %v328 = vmul.f32 %v326, %v326
      %v329 = vsub.f32 %v327, %v328
      %v330 = vmax.f32 %v329, 0.0
      %v331 = vadd.f32 %v330, 1e-05
      %v332 = vrsqrt.pop %v331
      %v333 = vlaneseq
      %v334 = vshrl.u32 %v333, 7
      %v335 = vsub.s32 0, %v334
      %v336 = vrot.slane %v167, %v335
      %v337 = vmul.f32 %v336, %v332
      %v338 = vadd.f32 %v337, 1.0
      %v339 = vmul.f32 %v166, %v338
      %v340 = vmul.f32 %v326, %v337
      %v341 = vlaneseq
      %v342 = vshrl.u32 %v341, 7
      %v343 = vsub.s32 0, %v342
      %v344 = vrot.slane %v168, %v343
      %v345 = vsub.f32 %v344, %v340
      %v346 = vadd.f32 %v339, %v345
      %347 = vst [vmem:[%s165] sm:$0xff] %v346
      %p348 = scmp.lt.s32.totalorder %s14, 1
      %s349 = scalar_select %p348, %s14, 1
      %s350 = smul.addr %s349, 8
      %s351 = scalar_lea.vmem %s3, %s350
      // Predicated region
      $region33: #{prenorm_residual0.1} parent=31 // pred_check
        %p352 = pneg %p100
      $region34: #{prenorm_residual0.1} parent=31 // pred_check_branch
        %354 = sbr.rel (%p352) target = $region36
      $region35: #{prenorm_residual0.1} parent=31 // pred_region
        _
      $region36: #{prenorm_residual0.1} parent=31 // pred_fallthru
        _
    $region32: #{prenorm_residual0.1} parent=5 // pred_fallthru
      _
    %p355 = scmp.le.s32.totalorder 2, %s9
    // Predicated region
    $region37: #{prenorm_residual0.1} parent=5 // pred_check
      %p356 = pneg %p355
    $region38: #{prenorm_residual0.1} parent=5 // pred_check_branch
      %358 = sbr.rel (%p356) target = $region40
    $region39: #{prenorm_residual0.1} parent=5 // pred_region
      %s359 = ssub.s32 %s9, 2
      // Predicated region
      $region41: #{prenorm_residual0.1} parent=39 // pred_check
        %p360 = pneg %p106
      $region42: #{prenorm_residual0.1} parent=39 // pred_check_branch
        %362 = sbr.rel (%p360) target = $region44
      $region43: #{prenorm_residual0.1} parent=39 // pred_region
        %p363 = scmp.lt.s32.totalorder %s15, 1
        %s364 = scalar_select %p363, %s15, 1
        %s365 = smul.addr %s364, 8
        %s366 = scalar_lea.vmem %s3, %s365
      $region44: #{prenorm_residual0.1} parent=39 // pred_fallthru
        _
    $region40: #{prenorm_residual0.1} parent=5 // pred_fallthru
      _
  $region6: #{prenorm_residual0.1} parent=0 // loop_footer
    %s13 = sadd.s32 1, %s9
  $region7: #{prenorm_residual0.1} parent=0 // loop_footer_branch
    %8 = sbr.rel target = $region3
  $region8: #{prenorm_residual0.1} parent=0 // loop_exit
    _

</llo_original>
